<compile_context>
chip_gen: v5e
topology: v5e:2x2
jax: 0.10.0
libtpu: 0.0.40
codegen_flags: <defaults>
</compile_context>

<pallas_src>
import functools

import jax
import jax.numpy as jnp
from jax.experimental import pallas as pl
from jax.experimental.pallas import tpu as pltpu

LANES = 128
CHUNK_ROWS = 1024                 # in-kernel reduction chunk (multiple of 8)
SINGLE_MAX_BYTES = 512 * 1024     # per-input threshold for the single-block path


def _round_up(x, m):
    return ((x + m - 1) // m) * m


def _finalize_loss(t_sum, xt_sum, x_sum, epsilon):
    w = 1.0 / jnp.maximum(t_sum * t_sum, epsilon)
    intersect = xt_sum * w
    denom = jnp.maximum((x_sum + t_sum) * w, epsilon)
    return 1.0 - 2.0 * intersect / denom


def _vmem_capacity_bytes():
    """Physical VMEM per TensorCore; conservative (v7x-sized) fallback."""
    try:
        info = pltpu.get_tpu_info()
        cap = getattr(info, "vmem_capacity_bytes", None)
        if cap:
            return int(cap)
    except Exception:
        pass
    return 64 * 1024 * 1024


# ----------------------------- small-input path -----------------------------

def _gdl_single_kernel(x_ref, t_ref, loss_ref, *, epsilon):
    """Whole problem in one VMEM block (small inputs)."""
    x = x_ref[...].astype(jnp.float32)
    t = t_ref[...].astype(jnp.float32)
    t_sum = jnp.sum(t)
    xt_sum = jnp.sum(x * t)
    x_sum = jnp.sum(x)
    loss_ref[0] = _finalize_loss(t_sum, xt_sum, x_sum, epsilon)


# ------------------------- large-input streaming path ------------------------

def _gdl_tiled_kernel(x_ref, t_ref, part_ref, acc_ref, *,
                      valid_rows, tile_rows, tiles_per_slice, masking_needed):
    """Streaming reduction: grid = (slice, tile). Each slice accumulates a
    (3, 8, 128) partial in VMEM scratch and writes it once at its last tile."""
    s = pl.program_id(0)
    j = pl.program_id(1)

    @pl.when(j == 0)
    def _init():
        acc_ref[...] = jnp.zeros_like(acc_ref)

    g = s * tiles_per_slice + j          # global (unclamped) tile index
    base_row = g * tile_rows
    n_chunks = tile_rows // CHUNK_ROWS

    def _accumulate(masked):
        def body(c, carry):
            r0 = pl.multiple_of(c * CHUNK_ROWS, CHUNK_ROWS)
            x = x_ref[pl.ds(r0, CHUNK_ROWS), :].astype(jnp.float32)
            t = t_ref[pl.ds(r0, CHUNK_ROWS), :].astype(jnp.float32)
            if masked:
                # Rows past `valid_rows` (partial tail / duplicated OOB tile)
                # hold unspecified data -> zero them BEFORE any accumulation.
                rid = jax.lax.broadcasted_iota(jnp.int32, (CHUNK_ROWS, LANES), 0)
                keep = (rid + (base_row + r0)) < valid_rows
                zero = jnp.zeros_like(x)
                x = jnp.where(keep, x, zero)
                t = jnp.where(keep, t, zero)
            # One fused pass: both inputs are read once per chunk and reduced
            # to (8, 128) with pure VALU adds (no XLU in the steady state).
            x3 = x.reshape(CHUNK_ROWS // 8, 8, LANES)
            t3 = t.reshape(CHUNK_ROWS // 8, 8, LANES)
            acc_ref[0] += jnp.sum(t3, axis=0)        # sum(target)
            acc_ref[1] += jnp.sum(x3 * t3, axis=0)   # sum(input * target)
            acc_ref[2] += jnp.sum(x3, axis=0)        # sum(input)
            return carry
        jax.lax.fori_loop(0, n_chunks, body, 0)

    if masking_needed:
        # Only the tile(s) overlapping/past the array end pay the mask cost.
        needs_mask = (g + 1) * tile_rows > valid_rows

        @pl.when(jnp.logical_not(needs_mask))
        def _steady():
            _accumulate(masked=False)

        @pl.when(needs_mask)
        def _tail():
            _accumulate(masked=True)
    else:
        _accumulate(masked=False)

    @pl.when(j == pl.num_programs(1) - 1)
    def _done():
        part_ref[0] = acc_ref[...]


# ----------------------------------- wrapper ---------------------------------

def generalized_dice_loss(pred, target, *, epsilon=1e-5):
    if pred.shape != target.shape:
        raise ValueError(
            f"Target size ({target.shape}) must be the same as input size ({pred.shape})"
        )

    n = pred.size
    xf = pred.reshape(-1)
    tf = target.reshape(-1)

    # Keep floating inputs (f32 / bf16) in their own dtype and cast in-kernel
    # (halves HBM traffic for bf16). Non-float targets are cast here, matching
    # `target.float()` in the reference.
    if not jnp.issubdtype(xf.dtype, jnp.floating):
        xf = xf.astype(jnp.float32)
    if not jnp.issubdtype(tf.dtype, jnp.floating):
        tf = tf.astype(jnp.float32)

    if n % LANES != 0:
        # Rare fallback: zero padding leaves all three sums unchanged.
        pad = (-n) % LANES
        xf = jnp.pad(xf, (0, pad))
        tf = jnp.pad(tf, (0, pad))

    rows = xf.size // LANES
    x2 = xf.reshape(rows, LANES)
    t2 = tf.reshape(rows, LANES)
    eps = float(epsilon)

    itemsize = max(x2.dtype.itemsize, t2.dtype.itemsize)
    in_bytes = rows * LANES * itemsize

    if in_bytes <= SINGLE_MAX_BYTES:
        # Small-input fast path: one invocation, no grid/accumulator overhead.
        loss = pl.pallas_call(
            functools.partial(_gdl_single_kernel, epsilon=eps),
            out_shape=jax.ShapeDtypeStruct((1,), jnp.float32),
            in_specs=[
                pl.BlockSpec((rows, LANES), lambda: (0, 0)),
                pl.BlockSpec((rows, LANES), lambda: (0, 0)),
            ],
            out_specs=pl.BlockSpec(memory_space=pltpu.SMEM),
        )(x2, t2)
        return loss[0]

    # --- generation-aware, byte-based tile sizing --------------------------
    vmem_cap = _vmem_capacity_bytes()
    if vmem_cap >= 96 * 1024 * 1024:      # v5e / v6e: 128 MiB physical VMEM
        tile_bytes = 8 * 1024 * 1024      # per input per pipeline buffer
    else:                                 # v7x: 64 MiB physical VMEM per TC
        tile_bytes = 6 * 1024 * 1024
    tile_rows = tile_bytes // (LANES * itemsize)
    # Aim for >= ~4 pipeline steps on mid-size inputs (keeps overlap).
    cap_rows = max(CHUNK_ROWS, _round_up(pl.cdiv(rows, 4), CHUNK_ROWS))
    tile_rows = max(CHUNK_ROWS, min(tile_rows, cap_rows))   # multiple of CHUNK_ROWS

    num_tiles = pl.cdiv(rows, tile_rows)
    num_slices = 2 if num_tiles >= 2 else 1     # dual-TC split on v7x; serial elsewhere
    tiles_per_slice = pl.cdiv(num_tiles, num_slices)
    masking_needed = (num_slices * tiles_per_slice * tile_rows) != rows

    def in_map(s, j):
        # Clamp so duplicated / out-of-range tiles still DMA in-bounds data;
        # their contribution is zeroed by the in-kernel mask.
        return (jnp.minimum(s * tiles_per_slice + j, num_tiles - 1), 0)

    working = 2 * tile_rows * LANES * (x2.dtype.itemsize + t2.dtype.itemsize)
    vmem_limit = int(min(max(working + (8 << 20), (32 << 20)),
                         int(0.85 * vmem_cap)))

    parts = pl.pallas_call(
        functools.partial(_gdl_tiled_kernel,
                          valid_rows=rows, tile_rows=tile_rows,
                          tiles_per_slice=tiles_per_slice,
                          masking_needed=masking_needed),
        out_shape=jax.ShapeDtypeStruct((num_slices, 3, 8, LANES), jnp.float32),
        grid=(num_slices, tiles_per_slice),
        in_specs=[
            pl.BlockSpec((tile_rows, LANES), in_map),
            pl.BlockSpec((tile_rows, LANES), in_map),
        ],
        out_specs=pl.BlockSpec((1, 3, 8, LANES), lambda s, j: (s, 0, 0, 0)),
        scratch_shapes=[pltpu.VMEM((3, 8, LANES), jnp.float32)],
        compiler_params=pltpu.CompilerParams(
            dimension_semantics=("parallel", "arbitrary"),
            vmem_limit_bytes=vmem_limit,
        ),
    )(x2, t2)

    # Tiny wrapper-side fold of the per-slice partials into the loss.
    sums = jnp.sum(parts, axis=(0, 2, 3))      # (3,)
    return _finalize_loss(sums[0], sums[1], sums[2], eps)


def _reference(pred, target, epsilon=1e-5):
    x = pred.reshape(-1).astype(jnp.float32)
    t = target.reshape(-1).astype(jnp.float32)
    t_sum = jnp.sum(t)
    w = 1.0 / jnp.maximum(t_sum * t_sum, epsilon)
    inter = jnp.sum(x * t) * w
    denom = jnp.maximum(jnp.sum(x + t) * w, epsilon)
    return 1.0 - 2.0 * inter / denom


if __name__ == "__main__":
    key = jax.random.PRNGKey(0)
    k1, k2, k3, k4 = jax.random.split(key, 4)

    # Primary case: NCHW (2, 4, 16, 16), matching the PyTorch module's usage.
    B, C, H, W = 2, 4, 16, 16
    pred = jax.nn.sigmoid(jax.random.normal(k1, (B, C, H, W), dtype=jnp.float32))
    target = (jax.random.uniform(k2, (B, C, H, W)) > 0.5).astype(jnp.float32)

    loss = jax.block_until_ready(generalized_dice_loss(pred, target))
    ref = _reference(pred, target)
    assert jnp.allclose(loss, ref, atol=1e-5, rtol=1e-5), (loss, ref)

    # Secondary case: exercises the tiled path — 2 slices, multi-chunk tiles,
    # and a masked partial tail tile (7200 rows, tile_rows = 2048).
    shape2 = (2, 4, 300, 384)
    pred2 = jax.nn.sigmoid(jax.random.normal(k3, shape2, dtype=jnp.float32))
    target2 = (jax.random.uniform(k4, shape2) > 0.5).astype(jnp.float32)

    loss2 = jax.block_until_ready(generalized_dice_loss(pred2, target2))
    ref2 = _reference(pred2, target2)
    assert jnp.allclose(loss2, ref2, atol=5e-5, rtol=5e-5), (loss2, ref2)

    # Tertiary case: bf16 inputs stay bf16 over HBM (byte-based tiling path).
    pred3 = pred2.astype(jnp.bfloat16)
    target3 = target2.astype(jnp.bfloat16)
    loss3 = jax.block_until_ready(generalized_dice_loss(pred3, target3))
    ref3 = _reference(pred3, target3)
    assert jnp.allclose(loss3, ref3, atol=1e-3, rtol=1e-3), (loss3, ref3)

    print("KERNEL_OK")
</pallas_src>

<mosaic_0001>
module attributes {stable_mosaic.version = 11 : i64} {
  func.func @_gdl_single_kernel(%arg0: memref<16x128xf32, #tpu.memory_space<vmem>>, %arg1: memref<16x128xf32, #tpu.memory_space<vmem>>, %arg2: memref<1xf32, #tpu.memory_space<smem>>) attributes {dimension_semantics = [], scalar_prefetch = 0 : i64, scratch_operands = 0 : i64, tpu.core_type = #tpu.core_type<tc>} {
    %c0 = arith.constant 0 : index
    %c0_0 = arith.constant 0 : index
    %0 = vector.load %arg0[%c0, %c0_0] : memref<16x128xf32, #tpu.memory_space<vmem>>, vector<16x128xf32>
    %c0_1 = arith.constant 0 : index
    %c0_2 = arith.constant 0 : index
    %1 = vector.load %arg1[%c0_1, %c0_2] : memref<16x128xf32, #tpu.memory_space<vmem>>, vector<16x128xf32>
    %2 = vector.shape_cast %1 : vector<16x128xf32> to vector<1x16x128xf32>
    %cst = arith.constant dense<0.000000e+00> : vector<1xf32>
    %3 = vector.multi_reduction <add>, %2, %cst [1, 2] : vector<1x16x128xf32> to vector<1xf32>
    %4 = vector.shape_cast %3 : vector<1xf32> to vector<1x1x1xf32>
    %5 = vector.extract %4[0, 0, 0] : f32 from vector<1x1x1xf32>
    %6 = arith.mulf %0, %1 : vector<16x128xf32>
    %7 = vector.shape_cast %6 : vector<16x128xf32> to vector<1x16x128xf32>
    %cst_3 = arith.constant dense<0.000000e+00> : vector<1xf32>
    %8 = vector.multi_reduction <add>, %7, %cst_3 [1, 2] : vector<1x16x128xf32> to vector<1xf32>
    %9 = vector.shape_cast %8 : vector<1xf32> to vector<1x1x1xf32>
    %10 = vector.extract %9[0, 0, 0] : f32 from vector<1x1x1xf32>
    %11 = vector.shape_cast %0 : vector<16x128xf32> to vector<1x16x128xf32>
    %cst_4 = arith.constant dense<0.000000e+00> : vector<1xf32>
    %12 = vector.multi_reduction <add>, %11, %cst_4 [1, 2] : vector<1x16x128xf32> to vector<1xf32>
    %13 = vector.shape_cast %12 : vector<1xf32> to vector<1x1x1xf32>
    %14 = vector.extract %13[0, 0, 0] : f32 from vector<1x1x1xf32>
    %15 = arith.mulf %5, %5 : f32
    %cst_5 = arith.constant 9.99999974E-6 : f32
    %16 = arith.maximumf %15, %cst_5 : f32
    %cst_6 = arith.constant 1.000000e+00 : f32
    %17 = arith.divf %cst_6, %16 : f32
    %18 = arith.mulf %10, %17 : f32
    %19 = arith.addf %14, %5 : f32
    %20 = arith.mulf %19, %17 : f32
    %cst_7 = arith.constant 9.99999974E-6 : f32
    %21 = arith.maximumf %20, %cst_7 : f32
    %cst_8 = arith.constant 2.000000e+00 : f32
    %22 = arith.mulf %cst_8, %18 : f32
    %23 = arith.divf %22, %21 : f32
    %cst_9 = arith.constant 1.000000e+00 : f32
    %24 = arith.subf %cst_9, %23 : f32
    %c0_10 = arith.constant 0 : index
    %25 = memref.load %arg2[%c0_10] : memref<1xf32, #tpu.memory_space<smem>>
    memref.store %24, %arg2[%c0_10] : memref<1xf32, #tpu.memory_space<smem>>
    return
  }
}

</mosaic_0001>

<llo_original>
// kernel: tpu_custom_call.1
$region0: #{tpu_custom_call.1}
  #allocation0 [shape = 'u32[]', space=smem, size = 0x4, offset = 0x4, fixed_abs, tag = 'smem constant byte address 0x4 - core index']
  #allocation1 [shape = 'u32[72,128]{1,0:T(1,128)}', space=vmem, size = 0x9000, scoped, tag = 'internal scratch']
  %s0 = inlined_call_operand.hbm [shape: f32[16,128], index: 0, kind: input, shape index: {}]
  %s1 = inlined_call_operand.hbm [shape: f32[16,128], index: 1, kind: input, shape index: {}]
  %s2 = inlined_call_operand.hbm [shape: f32[1], index: 2, kind: output, shape index: {}]
  %s3 = sld [smem:[#allocation0]]
  $region26: #{tpu_custom_call.1} parent=0
    _
  %s5 = ssub.s32 1, %s3
  %s6 = scalar_select 0, %s5, %s3
  $region1: #{tpu_custom_call.1} parent=0
    #allocation2 [shape = 'u8[8192]{0}', space=vmem, size = 0x2000, scoped, tag = 'input window, operand 0, single buffered']
    #allocation3 [shape = 's32[1]{0}', space=sflag, size = 0x4, scoped, tag = 'scoped memory for tpu_custom_call.1']
    #allocation4 [shape = 's32[1]{0}', space=sflag, size = 0x4, scoped, tag = 'scoped memory for tpu_custom_call.1']
    #allocation5 [shape = 'u8[8192]{0}', space=vmem, size = 0x2000, scoped, tag = 'input window, operand 1, single buffered']
    #allocation6 [shape = 's32[1]{0}', space=sflag, size = 0x4, scoped, tag = 'scoped memory for tpu_custom_call.1']
    #allocation7 [shape = 'u8[512]{0}', space=smem, size = 0x200, scoped, tag = 'output window, operand 0, single buffered']
    %7 = vsyncpa [#allocation3], 0
    %8 = vsyncpa [#allocation6], 0
    %9 = vsyncpa [#allocation4], 0
    // Predicated region
    $region2: #{tpu_custom_call.1} parent=1 // pred_check
      _
    $region3: #{tpu_custom_call.1} parent=1 // pred_check_branch
      %11 = sbr.rel (0) target = $region5
    $region4: #{tpu_custom_call.1} parent=1 // pred_region
      %13 = vsyncadd [#allocation3], 0
      %s14 = sshll.u32 %s0, 4
      %s15 = int_to_ptr.hbm [resolvable:$true] %s14
      %s16 = sshll.u32 [#allocation2], 4
      %s17 = int_to_ptr.vmem [resolvable:$true] %s16
      %22 = dma.hbm_to_vmem [thread:$0]  %s15, 256, %s17, [#allocation3], 128, 128, 8
    $region5: #{tpu_custom_call.1} parent=1 // pred_fallthru
      _
    // Predicated region
    $region6: #{tpu_custom_call.1} parent=1 // pred_check
      _
    $region7: #{tpu_custom_call.1} parent=1 // pred_check_branch
      %24 = sbr.rel (0) target = $region9
    $region8: #{tpu_custom_call.1} parent=1 // pred_region
      %26 = vsyncadd [#allocation6], 0
      %s27 = sshll.u32 %s1, 4
      %s28 = int_to_ptr.hbm [resolvable:$true] %s27
      %s29 = sshll.u32 [#allocation5], 4
      %s30 = int_to_ptr.vmem [resolvable:$true] %s29
      %35 = dma.hbm_to_vmem [thread:$0]  %s28, 256, %s30, [#allocation6], 128, 128, 8
    $region9: #{tpu_custom_call.1} parent=1 // pred_fallthru
      _
    // Predicated region
    $region10: #{tpu_custom_call.1} parent=1 // pred_check
      _
    $region11: #{tpu_custom_call.1} parent=1 // pred_check_branch
      %37 = sbr.rel (0) target = $region13
    $region12: #{tpu_custom_call.1} parent=1 // pred_region
      %39 = dma.done [#allocation3], 256
    $region13: #{tpu_custom_call.1} parent=1 // pred_fallthru
      _
    // Predicated region
    $region14: #{tpu_custom_call.1} parent=1 // pred_check
      _
    $region15: #{tpu_custom_call.1} parent=1 // pred_check_branch
      %41 = sbr.rel (0) target = $region17
    $region16: #{tpu_custom_call.1} parent=1 // pred_region
      %43 = dma.done [#allocation6], 256
    $region17: #{tpu_custom_call.1} parent=1 // pred_fallthru
      _
    %v44 = vld [vmem:[#allocation2] sm:$0xff]
    %v45 = vld [vmem:[#allocation2 + $0x8] sm:$0xff]
    %v46 = vld [vmem:[#allocation5] sm:$0xff]
    %v47 = vld [vmem:[#allocation5 + $0x8] sm:$0xff]
    %v48 = vadd.f32 %v46, %v47
    %49 = vadd.xlane.f32.xlu0 %v48
    %v50 = vpop.xlane.xlu0 %49
    %v51 = vrot.slane %v50, 4
    %v52 = vadd.f32 %v50, %v51
    %v53 = vrot.slane %v52, 2
    %v54 = vadd.f32 %v52, %v53
    %v55 = vrot.slane %v54, 1
    %v56 = vadd.f32 %v54, %v55
    %s57 = vtos %v56
    %v58 = vmul.f32 %v44, %v46
    %v59 = vmul.f32 %v45, %v47
    %v60 = vadd.f32 %v58, %v59
    %61 = vadd.xlane.f32.xlu0 %v60
    %v62 = vpop.xlane.xlu0 %61
    %v63 = vrot.slane %v62, 4
    %v64 = vadd.f32 %v62, %v63
    %v65 = vrot.slane %v64, 2
    %v66 = vadd.f32 %v64, %v65
    %v67 = vrot.slane %v66, 1
    %v68 = vadd.f32 %v66, %v67
    %s69 = vtos %v68
    %v70 = vadd.f32 %v44, %v45
    %71 = vadd.xlane.f32.xlu0 %v70
    %v72 = vpop.xlane.xlu0 %71
    %v73 = vrot.slane %v72, 4
    %v74 = vadd.f32 %v72, %v73
    %v75 = vrot.slane %v74, 2
    %v76 = vadd.f32 %v74, %v75
    %v77 = vrot.slane %v76, 1
    %v78 = vadd.f32 %v76, %v77
    %s79 = vtos %v78
    %s80 = smul.f32 %s57, %s57
    %s81 = smax.f32 %s80, 1e-05
    %v82 = vstv %s81
    %v83 = vrcp.pop %v82
    %v84 = vmul.f32 %v82, %v83
    %v85 = vsub.f32 1.0, %v84
    %v86 = vmul.f32 %v83, %v85
    %v87 = vadd.f32 %v83, %v86
    %vm88 = vweird.f32 %v82
    %vm89 = vweird.f32 %v83
    %vm90 = vmor %vm88, %vm89
    %v91 = vsel %vm90, %v83, %v87
    %v92 = vand.u32 2147483647, %v82
    %vm93 = vcmp.eq.f32.partialorder %v92, 8.507059e+37
    %v94 = vand.u32 %v82, 2147483648
    %v95 = vor.u32 1.1754944e-38, %v94
    %v96 = vsel %vm93, %v95, %v91
    %s97 = vtos %v96
    %s98 = smul.f32 %s69, %s97
    %s99 = sadd.f32 %s79, %s57
    %s100 = smul.f32 %s99, %s97
    %s101 = smax.f32 %s100, 1e-05
    %s102 = smul.f32 %s98, 2.0
    %v103 = vstv %s101
    %v104 = vrcp.pop %v103
    %v105 = vmul.f32 %v103, %v104
    %v106 = vsub.f32 1.0, %v105
    %v107 = vmul.f32 %v104, %v106
    %v108 = vadd.f32 %v104, %v107
    %vm109 = vweird.f32 %v103
    %vm110 = vweird.f32 %v104
    %vm111 = vmor %vm109, %vm110
    %v112 = vsel %vm111, %v104, %v108
    %v113 = vand.u32 2147483647, %v103
    %vm114 = vcmp.eq.f32.partialorder %v113, 8.507059e+37
    %v115 = vand.u32 %v103, 2147483648
    %v116 = vor.u32 1.1754944e-38, %v115
    %v117 = vsel %vm114, %v116, %v112
    %s118 = vtos %v117
    %s119 = smul.f32 %s102, %s118
    %s120 = ssub.f32 1.0, %s119
    %s121 = scalar_lea.smem [#allocation7], 0
    %122 = sst [smem:[%s121]] %s120
    // Predicated region
    $region18: #{tpu_custom_call.1} parent=1 // pred_check
      _
    $region19: #{tpu_custom_call.1} parent=1 // pred_check_branch
      %124 = sbr.rel (0) target = $region21
    $region20: #{tpu_custom_call.1} parent=1 // pred_region
      %126 = vsyncadd [#allocation4], 0
      %s128 = sshll.u32 %s2, 4
      %s129 = int_to_ptr.hbm [resolvable:$true] %s128
      %131 = dma.smem_to_hbm [#allocation7], 16, %s129, [#allocation4]
    $region21: #{tpu_custom_call.1} parent=1 // pred_fallthru
      _
    // Predicated region
    $region22: #{tpu_custom_call.1} parent=1 // pred_check
      _
    $region23: #{tpu_custom_call.1} parent=1 // pred_check_branch
      %133 = sbr.rel (0) target = $region25
    $region24: #{tpu_custom_call.1} parent=1 // pred_region
      %135 = dma.done [#allocation4], 16
    $region25: #{tpu_custom_call.1} parent=1 // pred_fallthru
      _
    %136 = sfence
    %137 = vsyncpa [#allocation3], 1
    %138 = vsyncpa [#allocation6], 1
    %139 = vsyncpa [#allocation4], 1

</llo_original>
